<compile_context>
chip_gen: v7x
topology: tpu7x:2x2x1
jax: 0.10.0
libtpu: 0.0.40
codegen_flags: <defaults>
</compile_context>

<pallas_src>
import functools

import numpy as np
import jax
import jax.numpy as jnp
from jax.experimental import pallas as pl
from jax.experimental.pallas import tpu as pltpu


# ----------------------------- fused Pallas kernel ---------------------------

def _fused_forward_kernel(x_ref, w1_ref, w2_ref, w34_ref, o_ref, *, img_h):
    """conv1+swish -> conv2+swish -> (v6 - v1) -> conv3 (+ folded 1x1 conv4).

    Layout: activations are 2-D channels-last: rows = (n, h), lanes = (w, c).
    Each conv's H taps (k_h=3, stride 1, pad 1) come from sublane rolls with
    per-image boundary masks; W/Cin/Cout taps are folded host-side so each
    conv is ONE bf16 MXU matmul:
        out = concat([roll_up(a), a, roll_down(a)], lanes) @ slab[:3K] + slab[3K]
    """
    f32 = jnp.float32
    nrows = x_ref.shape[0]

    # Per-image H-boundary masks (rows are packed as n*img_h + h).
    row = jax.lax.broadcasted_iota(jnp.int32, (nrows, 1), 0)
    hpos = row % img_h
    not_top = hpos != 0              # tap 0 reads row h-1 (invalid at h == 0)
    not_bot = hpos != (img_h - 1)    # tap 2 reads row h+1 (invalid at h == H-1)

    def taps(a):
        # (rows, K) f32 -> (rows, 3K) bf16 : [row h-1 | row h | row h+1]
        up = jnp.where(not_top, pltpu.roll(a, 1, 0), 0.0)
        dn = jnp.where(not_bot, pltpu.roll(a, nrows - 1, 0), 0.0)
        return jnp.concatenate([up, a, dn], axis=1).astype(jnp.bfloat16)

    def conv(a, w_ref):
        a_cat = taps(a)
        km = a_cat.shape[1]                       # static: 3 * K
        z = jnp.dot(a_cat, w_ref[:km, :], preferred_element_type=f32)
        return z + w_ref[km:km + 1, :].astype(f32)    # bias row of the slab

    def swish(z):                                 # z * sigmoid(z), f32 math
        return z * pl.reciprocal(1.0 + jnp.exp(-z), approx=True)

    x = x_ref[...]                    # (rows, 256) f32, zero-padded lanes
    z1 = conv(x, w1_ref)              # v1   (rows, 128); lanes (w<10, c<8)
    v3 = swish(z1)                    # v1 * sigmoid(v1)
    z2 = conv(v3, w2_ref)             # v4, already broadcast across W (see fold)
    v6 = swish(z2)                    # v4 * sigmoid(v4)
    v7 = v6 - z1                      # v6 - v1 : plain VPU subtract
    o_ref[...] = conv(v7, w34_ref)    # conv3 with conv4 (1x1) folded in


# --------------------------- host-side weight folding ------------------------

def _round_up(v, m):
    return -(-v // m) * m


def _out_size(size, k, s, p, d):
    return (size + 2 * p - d * (k - 1) - 1) // s + 1


def _tap_matrices(weight, win, sw, pw, dw):
    """Fold the W-axis im2col into the conv weight.

    Returns (m, wout) with m[i] of shape (win*cin, wout*cout) such that, for
    channels-last (w, c) lane packing, tap i's contribution is act_shift_i @ m[i].
    """
    weight = np.asarray(weight, np.float64)
    cout, cin, kh, kw = weight.shape
    wout = _out_size(win, kw, sw, pw, dw)
    sel = np.zeros((win, wout, kw), np.float64)
    for wo in range(wout):
        for j in range(kw):
            w = wo * sw - pw + j * dw
            if 0 <= w < win:
                sel[w, wo, j] = 1.0
    m = np.einsum('abj,ocij->iacbo', sel, weight)
    return m.reshape(kh, win * cin, wout * cout), wout


def _build_slab(taps_m, bias_row, k_pad, n_pad):
    """One bf16 slab per conv: rows [0, 3*k_pad) = stacked K-padded taps,
    row 3*k_pad = bias row, remaining rows zero (16-row bf16 tile alignment)."""
    kh, k, nn = taps_m.shape
    rows = kh * k_pad
    slab = np.zeros((_round_up(rows + 1, 16), n_pad), np.float64)
    for i in range(kh):
        slab[i * k_pad:i * k_pad + k, :nn] = taps_m[i]
    slab[rows, :bias_row.shape[0]] = bias_row
    return jnp.asarray(slab, dtype=jnp.bfloat16)


def build_forward(params, x_shape):
    """One-time host-side weight folding; returns (jitted forward, weight slabs)."""
    n, cin, h, win = x_shape
    w1, b1 = np.asarray(params["w1"], np.float64), np.asarray(params["b1"], np.float64)
    w2, b2 = np.asarray(params["w2"], np.float64), np.asarray(params["b2"], np.float64)
    w3, b3 = np.asarray(params["w3"], np.float64), np.asarray(params["b3"], np.float64)
    w4, b4 = np.asarray(params["w4"], np.float64), np.asarray(params["b4"], np.float64)
    c1, c2, c3, c4 = w1.shape[0], w2.shape[0], w3.shape[0], w4.shape[0]

    # TODO(synk): the PyTorch module passes groups=(1, 2) to Conv2d, which is not
    # a valid int `groups`; conv1/conv2 are implemented as dense (groups=1) convs.
    m1, wo1 = _tap_matrices(w1, win, sw=3, pw=2, dw=2)
    m2, wo2 = _tap_matrices(w2, wo1, sw=3, pw=2, dw=2)
    # TODO(synk): with the module's original 1x6x64x64 input `v6 - v1` is not
    # broadcast-compatible in PyTorch either; the example width (36) makes
    # conv2's output width 1 so the subtraction broadcasts as PyTorch would.
    assert wo2 == 1, "v6 - v1 requires conv2 output width == 1"
    m3, wo3 = _tap_matrices(w3, wo1, sw=3, pw=3, dw=2)

    LANE = 128
    k1 = win * cin                      # input lanes        (216)
    k1p = _round_up(k1, LANE)           # padded             (256)
    l1 = wo1 * c1                       # conv1 out lanes    (80)
    l1p = _round_up(l1, LANE)           # padded             (128)
    lout = wo3 * c4                     # final out lanes    (64)
    loutp = _round_up(lout, LANE)       # padded             (128)
    nrows = n * h

    # conv1: pad K 216->256, N 80->128; bias folded in as the last slab row.
    slab1 = _build_slab(m1, np.tile(b1, wo1), k1p, l1p)

    # conv2: replicate the (single-W) output columns across the padded W axis so
    # z2 comes out already broadcast over W -> `v7 = v6 - z1` needs no tiling.
    assert l1p % c2 == 0
    reps = l1p // c2
    slab2 = _build_slab(np.tile(m2, (1, 1, reps)),
                        np.tile(np.tile(b2, wo2), reps), l1p, l1p)

    # conv3 with the 1x1 conv4 folded in (both linear, nothing between them).
    m4 = np.einsum('wv,oc->wcvo', np.eye(wo3), w4[:, :, 0, 0]).reshape(
        wo3 * c3, wo3 * c4)
    m34 = np.einsum('tkc,cd->tkd', m3, m4)
    b34 = np.tile(b3, wo3) @ m4 + np.tile(b4, wo3)
    slab34 = _build_slab(m34, b34, l1p, loutp)

    slabs = (slab1, slab2, slab34)
    kernel = functools.partial(_fused_forward_kernel, img_h=h)
    vmem = pl.BlockSpec(memory_space=pltpu.MemorySpace.VMEM)

    @jax.jit
    def forward(x, slabs):
        s1, s2, s34 = slabs
        # channels-last lane-dense 2-D layout: rows = (n, h), lanes = (w, c)
        x2d = x.transpose(0, 2, 3, 1).reshape(nrows, k1)
        x2d = jnp.pad(x2d, ((0, 0), (0, k1p - k1)))
        out2d = pl.pallas_call(
            kernel,
            out_shape=jax.ShapeDtypeStruct((nrows, loutp), jnp.float32),
            in_specs=[vmem] * 4,
            out_specs=vmem,
            # Gridless single-TC call: total operands ~0.7 MiB, 32 rows -> no
            # grid needed at this size (add a parallel row grid only if scaled).
        )(x2d, s1, s2, s34)
        # drop lane padding; back to NCHW only at the external boundary
        return out2d[:, :lout].reshape(n, h, wo3, c4).transpose(0, 3, 1, 2)

    return forward, slabs


# ------------------------------ plain-JAX reference --------------------------

def _conv_ref(x, w, b, stride, padding, dilation):
    out = jax.lax.conv_general_dilated(
        x, w, window_strides=stride,
        padding=[(padding[0], padding[0]), (padding[1], padding[1])],
        rhs_dilation=dilation,
        dimension_numbers=("NCHW", "OIHW", "NCHW"),
        precision=jax.lax.Precision.HIGHEST)
    return out + b.reshape(1, -1, 1, 1)


def reference_forward(x, p):
    v1 = _conv_ref(x, p["w1"], p["b1"], (1, 3), (1, 2), (1, 2))
    v3 = v1 * jax.nn.sigmoid(v1)
    v4 = _conv_ref(v3, p["w2"], p["b2"], (1, 3), (1, 2), (1, 2))
    v6 = v4 * jax.nn.sigmoid(v4)
    v7 = v6 - v1
    v8 = _conv_ref(v7, p["w3"], p["b3"], (1, 3), (1, 3), (1, 2))
    v9 = _conv_ref(v8, p["w4"], p["b4"], (1, 1), (0, 0), (1, 1))
    return v9


# ----------------------------------- main -----------------------------------

def _init_conv(key, c_out, c_in, kh, kw):
    fan_in = c_in * kh * kw
    bound = 1.0 / (fan_in ** 0.5)
    kw_, kb_ = jax.random.split(key)
    w = jax.random.uniform(kw_, (c_out, c_in, kh, kw), jnp.float32, -bound, bound)
    b = jax.random.uniform(kb_, (c_out,), jnp.float32, -bound, bound)
    return w, b


if __name__ == "__main__":
    key = jax.random.PRNGKey(0)
    kx, kc1, kc2, kc3, kc4 = jax.random.split(key, 5)

    # batch=2, C_in=6, H=16, W=36 (width chosen so `v6 - v1` broadcasts; see TODO).
    x = jax.random.normal(kx, (2, 6, 16, 36), jnp.float32)
    w1, b1 = _init_conv(kc1, 8, 6, 3, 7)
    w2, b2 = _init_conv(kc2, 8, 8, 3, 7)
    w3, b3 = _init_conv(kc3, 12, 8, 3, 4)
    w4, b4 = _init_conv(kc4, 16, 12, 1, 1)
    params = {"w1": w1, "b1": b1, "w2": w2, "b2": b2,
              "w3": w3, "b3": b3, "w4": w4, "b4": b4}

    forward, slabs = build_forward(params, x.shape)   # one-time weight folding
    out = jax.block_until_ready(forward(x, slabs))

    ref = jax.block_until_ready(reference_forward(x, params))
    assert out.shape == ref.shape, (out.shape, ref.shape)
    max_err = float(jnp.max(jnp.abs(out - ref)))
    assert jnp.allclose(out, ref, rtol=1e-2, atol=1e-2), max_err

    print("KERNEL_OK")
</pallas_src>

<mosaic_0001>
module attributes {stable_mosaic.version = 11 : i64} {
  func.func @_fused_forward_kernel(%arg0: memref<32x256xf32, #tpu.memory_space<vmem>>, %arg1: memref<784x128xbf16, #tpu.memory_space<vmem>>, %arg2: memref<400x128xbf16, #tpu.memory_space<vmem>>, %arg3: memref<400x128xbf16, #tpu.memory_space<vmem>>, %arg4: memref<32x128xf32, #tpu.memory_space<vmem>>) attributes {dimension_semantics = [], scalar_prefetch = 0 : i64, scratch_operands = 0 : i64, tpu.core_type = #tpu.core_type<tc>} {
    %0 = tpu.iota {dimensions = array<i32: 0>} : vector<32x1xi32>
    %c16_i32 = arith.constant 16 : i32
    %c0_i32 = arith.constant 0 : i32
    %1 = arith.cmpi eq, %c16_i32, %c0_i32 : i32
    %c1_i32 = arith.constant 1 : i32
    %2 = arith.select %1, %c1_i32, %c16_i32 : i32
    %3 = vector.broadcast %2 : i32 to vector<32x1xi32>
    %4 = arith.remsi %0, %3 : vector<32x1xi32>
    %c0_i32_0 = arith.constant 0 : i32
    %5 = vector.broadcast %c0_i32_0 : i32 to vector<32x1xi32>
    %6 = arith.cmpi ne, %4, %5 : vector<32x1xi32>
    %c0_i32_1 = arith.constant 0 : i32
    %7 = vector.broadcast %c0_i32_1 : i32 to vector<32x1xi32>
    %8 = arith.cmpi slt, %4, %7 : vector<32x1xi32>
    %c0_i32_2 = arith.constant 0 : i32
    %9 = arith.cmpi slt, %2, %c0_i32_2 : i32
    %10 = vector.broadcast %9 : i1 to vector<32x1xi1>
    %11 = vector.broadcast %10 : vector<32x1xi1> to vector<32x1xi1>
    %12 = arith.xori %8, %11 : vector<32x1xi1>
    %13 = arith.andi %12, %6 : vector<32x1xi1>
    %14 = vector.broadcast %2 : i32 to vector<32x1xi32>
    %15 = arith.addi %4, %14 : vector<32x1xi32>
    %16 = arith.select %13, %15, %4 : vector<32x1xi1>, vector<32x1xi32>
    %c0_i32_3 = arith.constant 0 : i32
    %17 = vector.broadcast %c0_i32_3 : i32 to vector<32x1xi32>
    %18 = arith.cmpi ne, %16, %17 : vector<32x1xi32>
    %c15_i32 = arith.constant 15 : i32
    %19 = vector.broadcast %c15_i32 : i32 to vector<32x1xi32>
    %20 = arith.cmpi ne, %16, %19 : vector<32x1xi32>
    %c0 = arith.constant 0 : index
    %c0_4 = arith.constant 0 : index
    %21 = vector.load %arg0[%c0, %c0_4] : memref<32x256xf32, #tpu.memory_space<vmem>>, vector<32x256xf32>
    %c1_i32_5 = arith.constant 1 : i32
    %22 = tpu.dynamic_rotate %21 by %c1_i32_5 dim 0 : vector<32x256xf32>, i32 -> vector<32x256xf32>
    %cst = arith.constant 0.000000e+00 : f32
    %23 = vector.shape_cast %18 : vector<32x1xi1> to vector<32x1xi1>
    %24 = vector.broadcast %23 : vector<32x1xi1> to vector<32x256xi1>
    %25 = vector.broadcast %cst : f32 to vector<32x256xf32>
    %26 = arith.select %24, %22, %25 : vector<32x256xi1>, vector<32x256xf32>
    %c31_i32 = arith.constant 31 : i32
    %27 = tpu.dynamic_rotate %21 by %c31_i32 dim 0 : vector<32x256xf32>, i32 -> vector<32x256xf32>
    %cst_6 = arith.constant 0.000000e+00 : f32
    %28 = vector.shape_cast %20 : vector<32x1xi1> to vector<32x1xi1>
    %29 = vector.broadcast %28 : vector<32x1xi1> to vector<32x256xi1>
    %30 = vector.broadcast %cst_6 : f32 to vector<32x256xf32>
    %31 = arith.select %29, %27, %30 : vector<32x256xi1>, vector<32x256xf32>
    %32 = tpu.concatenate %26, %21, %31 in 1 : vector<32x256xf32>, vector<32x256xf32>, vector<32x256xf32> -> vector<32x768xf32>
    %33 = arith.truncf %32 : vector<32x768xf32> to vector<32x768xbf16>
    %c0_7 = arith.constant 0 : index
    %c0_8 = arith.constant 0 : index
    %34 = vector.load %arg1[%c0_7, %c0_8] : memref<784x128xbf16, #tpu.memory_space<vmem>>, vector<768x128xbf16>
    %cst_9 = arith.constant dense<0.000000e+00> : vector<32x128xf32>
    %35 = tpu.matmul %33, %34, %cst_9 {dimension_numbers = #tpu.dot_dimension_numbers<[1], [0], [0], [1], [0, 0, 1, 1], [], []>} : vector<32x768xbf16>, vector<768x128xbf16>, vector<32x128xf32> -> vector<32x128xf32>
    %c768 = arith.constant 768 : index
    %c0_10 = arith.constant 0 : index
    %36 = vector.load %arg1[%c768, %c0_10] : memref<784x128xbf16, #tpu.memory_space<vmem>>, vector<1x128xbf16>
    %37 = arith.extf %36 : vector<1x128xbf16> to vector<1x128xf32>
    %38 = vector.broadcast %37 : vector<1x128xf32> to vector<32x128xf32>
    %39 = arith.addf %35, %38 : vector<32x128xf32>
    %cst_11 = arith.constant 0.000000e+00 : f32
    %40 = vector.broadcast %cst_11 : f32 to vector<32x128xf32>
    %41 = arith.subf %40, %39 : vector<32x128xf32>
    %42 = math.exp %41 : vector<32x128xf32>
    %cst_12 = arith.constant 1.000000e+00 : f32
    %43 = vector.broadcast %cst_12 : f32 to vector<32x128xf32>
    %44 = arith.addf %43, %42 : vector<32x128xf32>
    %45 = tpu.reciprocal %44 {approx = true} : vector<32x128xf32> -> vector<32x128xf32>
    %46 = arith.mulf %39, %45 : vector<32x128xf32>
    %c1_i32_13 = arith.constant 1 : i32
    %47 = tpu.dynamic_rotate %46 by %c1_i32_13 dim 0 : vector<32x128xf32>, i32 -> vector<32x128xf32>
    %cst_14 = arith.constant 0.000000e+00 : f32
    %48 = vector.shape_cast %18 : vector<32x1xi1> to vector<32x1xi1>
    %49 = vector.broadcast %48 : vector<32x1xi1> to vector<32x128xi1>
    %50 = vector.broadcast %cst_14 : f32 to vector<32x128xf32>
    %51 = arith.select %49, %47, %50 : vector<32x128xi1>, vector<32x128xf32>
    %c31_i32_15 = arith.constant 31 : i32
    %52 = tpu.dynamic_rotate %46 by %c31_i32_15 dim 0 : vector<32x128xf32>, i32 -> vector<32x128xf32>
    %cst_16 = arith.constant 0.000000e+00 : f32
    %53 = vector.shape_cast %20 : vector<32x1xi1> to vector<32x1xi1>
    %54 = vector.broadcast %53 : vector<32x1xi1> to vector<32x128xi1>
    %55 = vector.broadcast %cst_16 : f32 to vector<32x128xf32>
    %56 = arith.select %54, %52, %55 : vector<32x128xi1>, vector<32x128xf32>
    %57 = tpu.concatenate %51, %46, %56 in 1 : vector<32x128xf32>, vector<32x128xf32>, vector<32x128xf32> -> vector<32x384xf32>
    %58 = arith.truncf %57 : vector<32x384xf32> to vector<32x384xbf16>
    %c0_17 = arith.constant 0 : index
    %c0_18 = arith.constant 0 : index
    %59 = vector.load %arg2[%c0_17, %c0_18] : memref<400x128xbf16, #tpu.memory_space<vmem>>, vector<384x128xbf16>
    %cst_19 = arith.constant dense<0.000000e+00> : vector<32x128xf32>
    %60 = tpu.matmul %58, %59, %cst_19 {dimension_numbers = #tpu.dot_dimension_numbers<[1], [0], [0], [1], [0, 0, 1, 1], [], []>} : vector<32x384xbf16>, vector<384x128xbf16>, vector<32x128xf32> -> vector<32x128xf32>
    %c384 = arith.constant 384 : index
    %c0_20 = arith.constant 0 : index
    %61 = vector.load %arg2[%c384, %c0_20] : memref<400x128xbf16, #tpu.memory_space<vmem>>, vector<1x128xbf16>
    %62 = arith.extf %61 : vector<1x128xbf16> to vector<1x128xf32>
    %63 = vector.broadcast %62 : vector<1x128xf32> to vector<32x128xf32>
    %64 = arith.addf %60, %63 : vector<32x128xf32>
    %cst_21 = arith.constant 0.000000e+00 : f32
    %65 = vector.broadcast %cst_21 : f32 to vector<32x128xf32>
    %66 = arith.subf %65, %64 : vector<32x128xf32>
    %67 = math.exp %66 : vector<32x128xf32>
    %cst_22 = arith.constant 1.000000e+00 : f32
    %68 = vector.broadcast %cst_22 : f32 to vector<32x128xf32>
    %69 = arith.addf %68, %67 : vector<32x128xf32>
    %70 = tpu.reciprocal %69 {approx = true} : vector<32x128xf32> -> vector<32x128xf32>
    %71 = arith.mulf %64, %70 : vector<32x128xf32>
    %72 = arith.subf %71, %39 : vector<32x128xf32>
    %c1_i32_23 = arith.constant 1 : i32
    %73 = tpu.dynamic_rotate %72 by %c1_i32_23 dim 0 : vector<32x128xf32>, i32 -> vector<32x128xf32>
    %cst_24 = arith.constant 0.000000e+00 : f32
    %74 = vector.shape_cast %18 : vector<32x1xi1> to vector<32x1xi1>
    %75 = vector.broadcast %74 : vector<32x1xi1> to vector<32x128xi1>
    %76 = vector.broadcast %cst_24 : f32 to vector<32x128xf32>
    %77 = arith.select %75, %73, %76 : vector<32x128xi1>, vector<32x128xf32>
    %c31_i32_25 = arith.constant 31 : i32
    %78 = tpu.dynamic_rotate %72 by %c31_i32_25 dim 0 : vector<32x128xf32>, i32 -> vector<32x128xf32>
    %cst_26 = arith.constant 0.000000e+00 : f32
    %79 = vector.shape_cast %20 : vector<32x1xi1> to vector<32x1xi1>
    %80 = vector.broadcast %79 : vector<32x1xi1> to vector<32x128xi1>
    %81 = vector.broadcast %cst_26 : f32 to vector<32x128xf32>
    %82 = arith.select %80, %78, %81 : vector<32x128xi1>, vector<32x128xf32>
    %83 = tpu.concatenate %77, %72, %82 in 1 : vector<32x128xf32>, vector<32x128xf32>, vector<32x128xf32> -> vector<32x384xf32>
    %84 = arith.truncf %83 : vector<32x384xf32> to vector<32x384xbf16>
    %c0_27 = arith.constant 0 : index
    %c0_28 = arith.constant 0 : index
    %85 = vector.load %arg3[%c0_27, %c0_28] : memref<400x128xbf16, #tpu.memory_space<vmem>>, vector<384x128xbf16>
    %cst_29 = arith.constant dense<0.000000e+00> : vector<32x128xf32>
    %86 = tpu.matmul %84, %85, %cst_29 {dimension_numbers = #tpu.dot_dimension_numbers<[1], [0], [0], [1], [0, 0, 1, 1], [], []>} : vector<32x384xbf16>, vector<384x128xbf16>, vector<32x128xf32> -> vector<32x128xf32>
    %c384_30 = arith.constant 384 : index
    %c0_31 = arith.constant 0 : index
    %87 = vector.load %arg3[%c384_30, %c0_31] : memref<400x128xbf16, #tpu.memory_space<vmem>>, vector<1x128xbf16>
    %88 = arith.extf %87 : vector<1x128xbf16> to vector<1x128xf32>
    %89 = vector.broadcast %88 : vector<1x128xf32> to vector<32x128xf32>
    %90 = arith.addf %86, %89 : vector<32x128xf32>
    %c0_32 = arith.constant 0 : index
    %c0_33 = arith.constant 0 : index
    %91 = vector.load %arg4[%c0_32, %c0_33] : memref<32x128xf32, #tpu.memory_space<vmem>>, vector<32x128xf32>
    tpu.vector_store %arg4[%c0_32, %c0_33], %90 {strides = array<i32>} : memref<32x128xf32, #tpu.memory_space<vmem>>, vector<32x128xf32>,
    return
  }
}

</mosaic_0001>

<llo_original>
// kernel: forward.1
$region0: #{forward.1}
  #allocation0 [shape = 'u32[]', space=smem, size = 0x4, offset = 0x4, fixed_abs, tag = 'smem constant byte address 0x4 - core index']
  #allocation1 [shape = 'u32[144,128]{1,0:T(1,128)}', space=vmem, size = 0x12000, scoped, tag = 'internal scratch']
  %s0 = inlined_call_operand.vmem [shape: f32[32,256], index: 0, kind: input, shape index: {}]
  %s1 = inlined_call_operand.vmem [shape: bf16[784,128], index: 1, kind: input, shape index: {}]
  %s2 = inlined_call_operand.vmem [shape: bf16[400,128], index: 2, kind: input, shape index: {}]
  %s3 = inlined_call_operand.vmem [shape: bf16[400,128], index: 3, kind: input, shape index: {}]
  %s4 = inlined_call_operand.vmem [shape: f32[32,128], index: 4, kind: output, shape index: {}]
  %s5 = sld [smem:[#allocation0]]
  $region26: #{forward.1} parent=0
    _
  %s7 = ssub.s32 1, %s5
  %s8 = scalar_select 0, %s7, %s5
  // Predicated region
  $region2: #{forward.1} parent=0 // pred_check
    _
  $region3: #{forward.1} parent=0 // pred_check_branch
    %10 = sbr.rel (0) target = $region5
  $region4: #{forward.1} parent=0 // pred_region
    _
  $region5: #{forward.1} parent=0 // pred_fallthru
    _
  // Predicated region
  $region6: #{forward.1} parent=0 // pred_check
    _
  $region7: #{forward.1} parent=0 // pred_check_branch
    %12 = sbr.rel (0) target = $region9
  $region8: #{forward.1} parent=0 // pred_region
    _
  $region9: #{forward.1} parent=0 // pred_fallthru
    _
  // Predicated region
  $region10: #{forward.1} parent=0 // pred_check
    _
  $region11: #{forward.1} parent=0 // pred_check_branch
    %14 = sbr.rel (0) target = $region13
  $region12: #{forward.1} parent=0 // pred_region
    _
  $region13: #{forward.1} parent=0 // pred_fallthru
    _
  // Predicated region
  $region14: #{forward.1} parent=0 // pred_check
    _
  $region15: #{forward.1} parent=0 // pred_check_branch
    %16 = sbr.rel (0) target = $region17
  $region16: #{forward.1} parent=0 // pred_region
    _
  $region17: #{forward.1} parent=0 // pred_fallthru
    _
  %v18 = vlaneseq
  %v19 = vshrl.u32 %v18, 7
  %v20 = vadd.s32 %v19, 8
  %v21 = vadd.s32 %v19, 16
  %v22 = vadd.s32 %v19, 24
  %vm23 = vcmp.lt.s32.totalorder %v19, 0
  %v24 = vsub.s32 0, %v19
  %v25 = vsel %vm23, %v24, %v19
  %v26 = vshrl.u32 %v25, 4
  %v27 = vand.u32 %v25, 15
  %v28 = vsub.s32 0, %v27
  %v29 = vsel %vm23, %v28, %v27
  %vm30 = vcmp.lt.s32.totalorder %v20, 0
  %v31 = vsub.s32 0, %v20
  %v32 = vsel %vm30, %v31, %v20
  %v33 = vshrl.u32 %v32, 4
  %v34 = vand.u32 %v32, 15
  %v35 = vsub.s32 0, %v34
  %v36 = vsel %vm30, %v35, %v34
  %vm37 = vcmp.lt.s32.totalorder %v21, 0
  %v38 = vsub.s32 0, %v21
  %v39 = vsel %vm37, %v38, %v21
  %v40 = vshrl.u32 %v39, 4
  %v41 = vand.u32 %v39, 15
  %v42 = vsub.s32 0, %v41
  %v43 = vsel %vm37, %v42, %v41
  %vm44 = vcmp.lt.s32.totalorder %v22, 0
  %v45 = vsub.s32 0, %v22
  %v46 = vsel %vm44, %v45, %v22
  %v47 = vshrl.u32 %v46, 4
  %v48 = vand.u32 %v46, 15
  %v49 = vsub.s32 0, %v48
  %v50 = vsel %vm44, %v49, %v48
  %vm51 = vcmp.ne.s32.totalorder %v29, 0
  %vm52 = vcmp.ne.s32.totalorder %v36, 0
  %vm53 = vcmp.ne.s32.totalorder %v43, 0
  %vm54 = vcmp.ne.s32.totalorder %v50, 0
  %vm55 = vcmp.lt.s32.totalorder %v29, 0
  %vm56 = vcmp.lt.s32.totalorder %v36, 0
  %vm57 = vcmp.lt.s32.totalorder %v43, 0
  %vm58 = vcmp.lt.s32.totalorder %v50, 0
  %vm59 = vmand %vm55, %vm51
  %vm60 = vmand %vm56, %vm52
  %vm61 = vmand %vm57, %vm53
  %vm62 = vmand %vm58, %vm54
  %v63 = vadd.s32 %v29, 16
  %v64 = vadd.s32 %v36, 16
  %v65 = vadd.s32 %v43, 16
  %v66 = vadd.s32 %v50, 16
  %v67 = vsel %vm59, %v63, %v29
  %v68 = vsel %vm60, %v64, %v36
  %v69 = vsel %vm61, %v65, %v43
  %v70 = vsel %vm62, %v66, %v50
  %vm71 = vcmp.ne.s32.totalorder %v67, 0
  %vm72 = vcmp.ne.s32.totalorder %v68, 0
  %vm73 = vcmp.ne.s32.totalorder %v69, 0
  %vm74 = vcmp.ne.s32.totalorder %v70, 0
  %vm75 = vcmp.ne.s32.totalorder %v67, 15
  %vm76 = vcmp.ne.s32.totalorder %v68, 15
  %vm77 = vcmp.ne.s32.totalorder %v69, 15
  %vm78 = vcmp.ne.s32.totalorder %v70, 15
  %v79 = vld [vmem:[%s0] sm:$0xff]
  %v80 = vld [vmem:[%s0 + $0x8] sm:$0xff]
  %v81 = vld [vmem:[%s0 + $0x10] sm:$0xff]
  %v82 = vld [vmem:[%s0 + $0x18] sm:$0xff]
  %v83 = vld [vmem:[%s0 + $0x20] sm:$0xff]
  %v84 = vld [vmem:[%s0 + $0x28] sm:$0xff]
  %v85 = vld [vmem:[%s0 + $0x30] sm:$0xff]
  %v86 = vld [vmem:[%s0 + $0x38] sm:$0xff]
  %v87 = vrot.slane %v79, 7
  %v88 = vrot.slane %v80, 7
  %v89 = vrot.slane %v81, 7
  %v90 = vrot.slane %v82, 7
  %v91 = vrot.slane %v83, 7
  %v92 = vrot.slane %v84, 7
  %v93 = vrot.slane %v85, 7
  %v94 = vrot.slane %v86, 7
  %vm95 = vcmp.lt.s32.totalorder %v19, 1
  %v96 = vsel %vm95, %v91, %v93
  %v97 = vsel %vm95, %v92, %v94
  %v98 = vsel %vm95, %v89, %v91
  %v99 = vsel %vm95, %v90, %v92
  %v100 = vsel %vm95, %v87, %v89
  %v101 = vsel %vm95, %v88, %v90
  %v102 = vsel %vm95, %v93, %v87
  %v103 = vsel %vm95, %v94, %v88
  %v104 = vsel %vm71, 1, 0
  %v105 = vsel %vm72, 1, 0
  %v106 = vsel %vm73, 1, 0
  %v107 = vsel %vm74, 1, 0
  %vm108 = vcmp.eq.s32.totalorder %v104, 1
  %vm109 = vcmp.eq.s32.totalorder %v105, 1
  %vm110 = vcmp.eq.s32.totalorder %v106, 1
  %vm111 = vcmp.eq.s32.totalorder %v107, 1
  %v112 = vsel %vm108, %v102, 0.0
  %v113 = vsel %vm108, %v103, 0.0
  %v114 = vsel %vm109, %v100, 0.0
  %v115 = vsel %vm109, %v101, 0.0
  %v116 = vsel %vm110, %v98, 0.0
  %v117 = vsel %vm110, %v99, 0.0
  %v118 = vsel %vm111, %v96, 0.0
  %v119 = vsel %vm111, %v97, 0.0
  %v120 = vrot.slane %v79, 1
  %v121 = vrot.slane %v80, 1
  %v122 = vrot.slane %v81, 1
  %v123 = vrot.slane %v82, 1
  %v124 = vrot.slane %v83, 1
  %v125 = vrot.slane %v84, 1
  %v126 = vrot.slane %v85, 1
  %v127 = vrot.slane %v86, 1
  %vm128 = vcmp.lt.s32.totalorder %v19, 7
  %v129 = vsel %vm128, %v124, %v126
  %v130 = vsel %vm128, %v125, %v127
  %v131 = vsel %vm128, %v122, %v124
  %v132 = vsel %vm128, %v123, %v125
  %v133 = vsel %vm128, %v120, %v122
  %v134 = vsel %vm128, %v121, %v123
  %v135 = vsel %vm128, %v126, %v120
  %v136 = vsel %vm128, %v127, %v121
  %v137 = vsel %vm75, 1, 0
  %v138 = vsel %vm76, 1, 0
  %v139 = vsel %vm77, 1, 0
  %v140 = vsel %vm78, 1, 0
  %vm141 = vcmp.eq.s32.totalorder %v137, 1
  %vm142 = vcmp.eq.s32.totalorder %v138, 1
  %vm143 = vcmp.eq.s32.totalorder %v139, 1
  %vm144 = vcmp.eq.s32.totalorder %v140, 1
  %v145 = vsel %vm141, %v133, 0.0
  %v146 = vsel %vm141, %v134, 0.0
  %v147 = vsel %vm142, %v131, 0.0
  %v148 = vsel %vm142, %v132, 0.0
  %v149 = vsel %vm143, %v129, 0.0
  %v150 = vsel %vm143, %v130, 0.0
  %v151 = vsel %vm144, %v135, 0.0
  %v152 = vsel %vm144, %v136, 0.0
  %v153 = vpack.c.bf16 %v114, %v112
  %v154 = vpack.c.bf16 %v115, %v113
  %v155 = vpack.c.bf16 %v81, %v79
  %v156 = vpack.c.bf16 %v82, %v80
  %v157 = vpack.c.bf16 %v147, %v145
  %v158 = vpack.c.bf16 %v148, %v146
  %v159 = vpack.c.bf16 %v118, %v116
  %v160 = vpack.c.bf16 %v119, %v117
  %v161 = vpack.c.bf16 %v85, %v83
  %v162 = vpack.c.bf16 %v86, %v84
  %v163 = vpack.c.bf16 %v151, %v149
  %v164 = vpack.c.bf16 %v152, %v150
  %v165 = vld [vmem:[%s1] sm:$0xf]
  %v166 = vld [vmem:[%s1 + $0x4] sm:$0xf]
  %v167 = vld [vmem:[%s1 + $0x8] sm:$0xf]
  %v168 = vld [vmem:[%s1 + $0xc] sm:$0xf]
  %v169 = vld [vmem:[%s1 + $0x10] sm:$0xf]
  %v170 = vld [vmem:[%s1 + $0x14] sm:$0xf]
  %v171 = vld [vmem:[%s1 + $0x18] sm:$0xf]
  %v172 = vld [vmem:[%s1 + $0x1c] sm:$0xf]
  %v173 = vld [vmem:[%s1 + $0x20] sm:$0xf]
  %v174 = vld [vmem:[%s1 + $0x24] sm:$0xf]
  %v175 = vld [vmem:[%s1 + $0x28] sm:$0xf]
  %v176 = vld [vmem:[%s1 + $0x2c] sm:$0xf]
  %v177 = vld [vmem:[%s1 + $0x30] sm:$0xf]
  %v178 = vld [vmem:[%s1 + $0x34] sm:$0xf]
  %v179 = vld [vmem:[%s1 + $0x38] sm:$0xf]
  %v180 = vld [vmem:[%s1 + $0x3c] sm:$0xf]
  %v181 = vld [vmem:[%s1 + $0x40] sm:$0xf]
  %v182 = vld [vmem:[%s1 + $0x44] sm:$0xf]
  %v183 = vld [vmem:[%s1 + $0x48] sm:$0xf]
  %v184 = vld [vmem:[%s1 + $0x4c] sm:$0xf]
  %v185 = vld [vmem:[%s1 + $0x50] sm:$0xf]
  %v186 = vld [vmem:[%s1 + $0x54] sm:$0xf]
  %v187 = vld [vmem:[%s1 + $0x58] sm:$0xf]
  %v188 = vld [vmem:[%s1 + $0x5c] sm:$0xf]
  %v189 = vld [vmem:[%s1 + $0x60] sm:$0xf]
  %v190 = vld [vmem:[%s1 + $0x64] sm:$0xf]
  %v191 = vld [vmem:[%s1 + $0x68] sm:$0xf]
  %v192 = vld [vmem:[%s1 + $0x6c] sm:$0xf]
  %v193 = vld [vmem:[%s1 + $0x70] sm:$0xf]
  %v194 = vld [vmem:[%s1 + $0x74] sm:$0xf]
  %v195 = vld [vmem:[%s1 + $0x78] sm:$0xf]
  %v196 = vld [vmem:[%s1 + $0x7c] sm:$0xf]
  %v197 = vld [vmem:[%s1 + $0x80] sm:$0xf]
  %v198 = vld [vmem:[%s1 + $0x84] sm:$0xf]
  %v199 = vld [vmem:[%s1 + $0x88] sm:$0xf]
  %v200 = vld [vmem:[%s1 + $0x8c] sm:$0xf]
  %v201 = vld [vmem:[%s1 + $0x90] sm:$0xf]
  %v202 = vld [vmem:[%s1 + $0x94] sm:$0xf]
  %v203 = vld [vmem:[%s1 + $0x98] sm:$0xf]
  %v204 = vld [vmem:[%s1 + $0x9c] sm:$0xf]
  %v205 = vld [vmem:[%s1 + $0xa0] sm:$0xf]
  %v206 = vld [vmem:[%s1 + $0xa4] sm:$0xf]
  %v207 = vld [vmem:[%s1 + $0xa8] sm:$0xf]
  %v208 = vld [vmem:[%s1 + $0xac] sm:$0xf]
  %v209 = vld [vmem:[%s1 + $0xb0] sm:$0xf]
  %v210 = vld [vmem:[%s1 + $0xb4] sm:$0xf]
  %v211 = vld [vmem:[%s1 + $0xb8] sm:$0xf]
  %v212 = vld [vmem:[%s1 + $0xbc] sm:$0xf]
  %v213 = vld [vmem:[%s1 + $0xc0] sm:$0xf]
  %v214 = vld [vmem:[%s1 + $0xc4] sm:$0xf]
  %v215 = vld [vmem:[%s1 + $0xc8] sm:$0xf]
  %v216 = vld [vmem:[%s1 + $0xcc] sm:$0xf]
  %v217 = vld [vmem:[%s1 + $0xd0] sm:$0xf]
  %v218 = vld [vmem:[%s1 + $0xd4] sm:$0xf]
  %v219 = vld [vmem:[%s1 + $0xd8] sm:$0xf]
  %v220 = vld [vmem:[%s1 + $0xdc] sm:$0xf]
  %v221 = vld [vmem:[%s1 + $0xe0] sm:$0xf]
  %v222 = vld [vmem:[%s1 + $0xe4] sm:$0xf]
  %v223 = vld [vmem:[%s1 + $0xe8] sm:$0xf]
  %v224 = vld [vmem:[%s1 + $0xec] sm:$0xf]
  %v225 = vld [vmem:[%s1 + $0xf0] sm:$0xf]
  %v226 = vld [vmem:[%s1 + $0xf4] sm:$0xf]
  %v227 = vld [vmem:[%s1 + $0xf8] sm:$0xf]
  %v228 = vld [vmem:[%s1 + $0xfc] sm:$0xf]
  %v229 = vld [vmem:[%s1 + $0x100] sm:$0xf]
  %v230 = vld [vmem:[%s1 + $0x104] sm:$0xf]
  %v231 = vld [vmem:[%s1 + $0x108] sm:$0xf]
  %v232 = vld [vmem:[%s1 + $0x10c] sm:$0xf]
  %v233 = vld [vmem:[%s1 + $0x110] sm:$0xf]
  %v234 = vld [vmem:[%s1 + $0x114] sm:$0xf]
  %v235 = vld [vmem:[%s1 + $0x118] sm:$0xf]
  %v236 = vld [vmem:[%s1 + $0x11c] sm:$0xf]
  %v237 = vld [vmem:[%s1 + $0x120] sm:$0xf]
  %v238 = vld [vmem:[%s1 + $0x124] sm:$0xf]
  %v239 = vld [vmem:[%s1 + $0x128] sm:$0xf]
  %v240 = vld [vmem:[%s1 + $0x12c] sm:$0xf]
  %v241 = vld [vmem:[%s1 + $0x130] sm:$0xf]
  %v242 = vld [vmem:[%s1 + $0x134] sm:$0xf]
  %v243 = vld [vmem:[%s1 + $0x138] sm:$0xf]
  %v244 = vld [vmem:[%s1 + $0x13c] sm:$0xf]
  %v245 = vld [vmem:[%s1 + $0x140] sm:$0xf]
  %v246 = vld [vmem:[%s1 + $0x144] sm:$0xf]
  %v247 = vld [vmem:[%s1 + $0x148] sm:$0xf]
  %v248 = vld [vmem:[%s1 + $0x14c] sm:$0xf]
  %v249 = vld [vmem:[%s1 + $0x150] sm:$0xf]
  %v250 = vld [vmem:[%s1 + $0x154] sm:$0xf]
  %v251 = vld [vmem:[%s1 + $0x158] sm:$0xf]
  %v252 = vld [vmem:[%s1 + $0x15c] sm:$0xf]
  %v253 = vld [vmem:[%s1 + $0x160] sm:$0xf]
  %v254 = vld [vmem:[%s1 + $0x164] sm:$0xf]
  %v255 = vld [vmem:[%s1 + $0x168] sm:$0xf]
  %v256 = vld [vmem:[%s1 + $0x16c] sm:$0xf]
  %v257 = vld [vmem:[%s1 + $0x170] sm:$0xf]
  %v258 = vld [vmem:[%s1 + $0x174] sm:$0xf]
  %v259 = vld [vmem:[%s1 + $0x178] sm:$0xf]
  %v260 = vld [vmem:[%s1 + $0x17c] sm:$0xf]
  %v261 = vld [vmem:[%s1 + $0x180] sm:$0x1]
  %v262 = vunpack.c.l.bf16 %v261
  %v263 = vlaneseq
  %v264 = vshrl.u32 %v263, 7
  %v265 = vsub.s32 0, %v264
  %v266 = vrot.slane %v262, %v265
  %v363 = vunpack.c.l.b16 %v165
  %v364 = vunpack.c.l.b16 %v166
  %v365 = vunpack.c.l.b16 %v167
  %v366 = vunpack.c.l.b16 %v168
  %v367 = vunpack.c.l.b16 %v169
  %v368 = vunpack.c.l.b16 %v170
  %v369 = vunpack.c.l.b16 %v171
  %v370 = vunpack.c.l.b16 %v172
  %v371 = vunpack.c.l.b16 %v173
  %v372 = vunpack.c.l.b16 %v174
  %v373 = vunpack.c.l.b16 %v175
  %v374 = vunpack.c.l.b16 %v176
  %v375 = vunpack.c.l.b16 %v177
  %v376 = vunpack.c.l.b16 %v178
  %v377 = vunpack.c.l.b16 %v179
  %v378 = vunpack.c.l.b16 %v180
  %v379 = vunpack.c.l.b16 %v181
  %v380 = vunpack.c.l.b16 %v182
  %v381 = vunpack.c.l.b16 %v183
  %v382 = vunpack.c.l.b16 %v184
  %v383 = vunpack.c.l.b16 %v185
  %v384 = vunpack.c.l.b16 %v186
  %v385 = vunpack.c.l.b16 %v187
  %v386 = vunpack.c.l.b16 %v188
  %v387 = vunpack.c.l.b16 %v189
  %v388 = vunpack.c.l.b16 %v190
  %v389 = vunpack.c.l.b16 %v191
  %v390 = vunpack.c.l.b16 %v192
  %v391 = vunpack.c.l.b16 %v193
  %v392 = vunpack.c.l.b16 %v194
  %v393 = vunpack.c.l.b16 %v195
  %v394 = vunpack.c.l.b16 %v196
  %v395 = vunpack.c.l.b16 %v197
  %v396 = vunpack.c.l.b16 %v198
  %v397 = vunpack.c.l.b16 %v199
  %v398 = vunpack.c.l.b16 %v200
  %v399 = vunpack.c.l.b16 %v201
  %v400 = vunpack.c.l.b16 %v202
  %v401 = vunpack.c.l.b16 %v203
  %v402 = vunpack.c.l.b16 %v204
  %v403 = vunpack.c.l.b16 %v205
  %v404 = vunpack.c.l.b16 %v206
  %v405 = vunpack.c.l.b16 %v207
  %v406 = vunpack.c.l.b16 %v208
  %v407 = vunpack.c.l.b16 %v209
  %v408 = vunpack.c.l.b16 %v210
  %v409 = vunpack.c.l.b16 %v211
  %v410 = vunpack.c.l.b16 %v212
  %v411 = vunpack.c.l.b16 %v213
  %v412 = vunpack.c.l.b16 %v214
  %v413 = vunpack.c.l.b16 %v215
  %v414 = vunpack.c.l.b16 %v216
  %v415 = vunpack.c.l.b16 %v217
  %v416 = vunpack.c.l.b16 %v218
  %v417 = vunpack.c.l.b16 %v219
  %v418 = vunpack.c.l.b16 %v220
  %v419 = vunpack.c.l.b16 %v221
  %v420 = vunpack.c.l.b16 %v222
  %v421 = vunpack.c.l.b16 %v223
  %v422 = vunpack.c.l.b16 %v224
  %v423 = vunpack.c.l.b16 %v225
  %v424 = vunpack.c.l.b16 %v226
  %v425 = vunpack.c.l.b16 %v227
  %v426 = vunpack.c.l.b16 %v228
  %v427 = vunpack.c.l.b16 %v229
  %v428 = vunpack.c.l.b16 %v230
  %v429 = vunpack.c.l.b16 %v231
  %v430 = vunpack.c.l.b16 %v232
  %v431 = vunpack.c.l.b16 %v233
  %v432 = vunpack.c.l.b16 %v234
  %v433 = vunpack.c.l.b16 %v235
  %v434 = vunpack.c.l.b16 %v236
  %v435 = vunpack.c.l.b16 %v237
  %v436 = vunpack.c.l.b16 %v238
  %v437 = vunpack.c.l.b16 %v239
  %v438 = vunpack.c.l.b16 %v240
  %v439 = vunpack.c.l.b16 %v241
  %v440 = vunpack.c.l.b16 %v242
  %v441 = vunpack.c.l.b16 %v243
  %v442 = vunpack.c.l.b16 %v244
  %v443 = vunpack.c.l.b16 %v245
  %v444 = vunpack.c.l.b16 %v246
  %v445 = vunpack.c.l.b16 %v247
  %v446 = vunpack.c.l.b16 %v248
  %v447 = vunpack.c.l.b16 %v249
  %v448 = vunpack.c.l.b16 %v250
  %v449 = vunpack.c.l.b16 %v251
  %v450 = vunpack.c.l.b16 %v252
  %v451 = vunpack.c.l.b16 %v253
  %v452 = vunpack.c.l.b16 %v254
  %v453 = vunpack.c.l.b16 %v255
  %v454 = vunpack.c.l.b16 %v256
  %v455 = vunpack.c.l.b16 %v257
  %v456 = vunpack.c.l.b16 %v258
  %v457 = vunpack.c.l.b16 %v259
  %v458 = vunpack.c.l.b16 %v260
  %v459 = vpack.c.b16 %v364, %v363
  %v460 = vpack.c.b16 %v366, %v365
  %v461 = vpack.c.b16 %v368, %v367
  %v462 = vpack.c.b16 %v370, %v369
  %v463 = vpack.c.b16 %v372, %v371
  %v464 = vpack.c.b16 %v374, %v373
  %v465 = vpack.c.b16 %v376, %v375
  %v466 = vpack.c.b16 %v378, %v377
  %v467 = vpack.c.b16 %v380, %v379
  %v468 = vpack.c.b16 %v382, %v381
  %v469 = vpack.c.b16 %v384, %v383
  %v470 = vpack.c.b16 %v386, %v385
  %v471 = vpack.c.b16 %v388, %v387
  %v472 = vpack.c.b16 %v390, %v389
  %v473 = vpack.c.b16 %v392, %v391
  %v474 = vpack.c.b16 %v394, %v393
  %v475 = vpack.c.b16 %v396, %v395
  %v476 = vpack.c.b16 %v398, %v397
  %v477 = vpack.c.b16 %v400, %v399
  %v478 = vpack.c.b16 %v402, %v401
  %v479 = vpack.c.b16 %v404, %v403
  %v480 = vpack.c.b16 %v406, %v405
  %v481 = vpack.c.b16 %v408, %v407
  %v482 = vpack.c.b16 %v410, %v409
  %v483 = vpack.c.b16 %v412, %v411
  %v484 = vpack.c.b16 %v414, %v413
  %v485 = vpack.c.b16 %v416, %v415
  %v486 = vpack.c.b16 %v418, %v417
  %v487 = vpack.c.b16 %v420, %v419
  %v488 = vpack.c.b16 %v422, %v421
  %v489 = vpack.c.b16 %v424, %v423
  %v490 = vpack.c.b16 %v426, %v425
  %v491 = vpack.c.b16 %v428, %v427
  %v492 = vpack.c.b16 %v430, %v429
  %v493 = vpack.c.b16 %v432, %v431
  %v494 = vpack.c.b16 %v434, %v433
  %v495 = vpack.c.b16 %v436, %v435
  %v496 = vpack.c.b16 %v438, %v437
  %v497 = vpack.c.b16 %v440, %v439
  %v498 = vpack.c.b16 %v442, %v441
  %v499 = vpack.c.b16 %v444, %v443
  %v500 = vpack.c.b16 %v446, %v445
  %v501 = vpack.c.b16 %v448, %v447
  %v502 = vpack.c.b16 %v450, %v449
  %v503 = vpack.c.b16 %v452, %v451
  %v504 = vpack.c.b16 %v454, %v453
  %v505 = vpack.c.b16 %v456, %v455
  %v506 = vpack.c.b16 %v458, %v457
  %555 = vmatprep.subr.bf16.mxu0 0
  %556 = vmatpush1.bf16.msra.mxu0 %v459
  %557 = vmatprep.subr.bf16.mxu0 0
  %558 = vmatpush1.bf16.msra.mxu0 %v460
  %559 = vmatprep.subr.bf16.mxu0 0
  %560 = vmatpush1.bf16.msra.mxu0 %v461
  %561 = vmatprep.subr.bf16.mxu0 0
  %562 = vmatpush1.bf16.msra.mxu0 %v462
  %563 = vmatprep.subr.bf16.mxu0 0
  %564 = vmatpush1.bf16.msra.mxu0 %v463
  %565 = vmatprep.subr.bf16.mxu0 0
  %566 = vmatpush1.bf16.msra.mxu0 %v464
  %567 = vmatprep.subr.bf16.mxu0 0
  %568 = vmatpush1.bf16.msra.mxu0 %v465
  %569 = vmatprep.subr.bf16.mxu0 0
  %570 = vmatpush1.bf16.msra.mxu0 %v466
  %571 = vmatprep.subr.bf16.mxu0 0
  %572 = vmatpush1.bf16.msra.mxu0 %v467
  %573 = vmatprep.subr.bf16.mxu0 0
  %574 = vmatpush1.bf16.msra.mxu0 %v468
  %575 = vmatprep.subr.bf16.mxu0 0
  %576 = vmatpush1.bf16.msra.mxu0 %v469
  %577 = vmatprep.subr.bf16.mxu0 0
  %578 = vmatpush1.bf16.msra.mxu0 %v470
  %579 = vmatprep.subr.bf16.mxu0 0
  %580 = vmatpush1.bf16.msra.mxu0 %v471
  %581 = vmatprep.subr.bf16.mxu0 0
  %582 = vmatpush1.bf16.msra.mxu0 %v472
  %583 = vmatprep.subr.bf16.mxu0 0
  %584 = vmatpush1.bf16.msra.mxu0 %v473
  %585 = vmatprep.subr.bf16.mxu0 0
  %586 = vmatpush1.bf16.msra.mxu0 %v474
  %587 = vmatprep.mubr.bf16.mxu0 %v154
  %588 = vmatmul.mubr.bf16.gmra.mrb[0].mxu0 %v153
  %v589 = vpop.f32.mrb[0].mxu0
  %v590 = vadd.f32 %v266, %v589
  %v591 = vpop.f32.mrb[0].mxu0
  %v592 = vpop.f32.mrb[0].mxu0
  %v593 = vadd.f32 %v266, %v592
  %v594 = vpop.f32.mrb[0].mxu0
  %595 = vmatprep.mubr.bf16.mxu0 %v160
  %596 = vmatmul.mubr.bf16.gmra.mrb[0].mxu0 %v159
  %v597 = vpop.f32.mrb[0].mxu0
  %v598 = vadd.f32 %v266, %v597
  %v599 = vpop.f32.mrb[0].mxu0
  %v600 = vpop.f32.mrb[0].mxu0
  %v601 = vadd.f32 %v266, %v600
  %v602 = vpop.f32.mrb[0].mxu0
  %603 = vdwg.mxu0
  %604 = vmatprep.subr.bf16.mxu0 0
  %605 = vmatpush1.bf16.msra.mxu0 %v475
  %606 = vmatprep.subr.bf16.mxu0 0
  %607 = vmatpush1.bf16.msra.mxu0 %v476
  %608 = vmatprep.subr.bf16.mxu0 0
  %609 = vmatpush1.bf16.msra.mxu0 %v477
  %610 = vmatprep.subr.bf16.mxu0 0
  %611 = vmatpush1.bf16.msra.mxu0 %v478
  %612 = vmatprep.subr.bf16.mxu0 0
  %613 = vmatpush1.bf16.msra.mxu0 %v479
  %614 = vmatprep.subr.bf16.mxu0 0
  %615 = vmatpush1.bf16.msra.mxu0 %v480
  %616 = vmatprep.subr.bf16.mxu0 0
  %617 = vmatpush1.bf16.msra.mxu0 %v481
  %618 = vmatprep.subr.bf16.mxu0 0
  %619 = vmatpush1.bf16.msra.mxu0 %v482
  %620 = vmatprep.subr.bf16.mxu0 0
  %621 = vmatpush1.bf16.msra.mxu0 %v483
  %622 = vmatprep.subr.bf16.mxu0 0
  %623 = vmatpush1.bf16.msra.mxu0 %v484
  %624 = vmatprep.subr.bf16.mxu0 0
  %625 = vmatpush1.bf16.msra.mxu0 %v485
  %626 = vmatprep.subr.bf16.mxu0 0
  %627 = vmatpush1.bf16.msra.mxu0 %v486
  %628 = vmatprep.subr.bf16.mxu0 0
  %629 = vmatpush1.bf16.msra.mxu0 %v487
  %630 = vmatprep.subr.bf16.mxu0 0
  %631 = vmatpush1.bf16.msra.mxu0 %v488
  %632 = vmatprep.subr.bf16.mxu0 0
  %633 = vmatpush1.bf16.msra.mxu0 %v489
  %634 = vmatprep.subr.bf16.mxu0 0
  %635 = vmatpush1.bf16.msra.mxu0 %v490
  %636 = vmatprep.mubr.bf16.mxu0 %v156
  %637 = vmatmul.mubr.bf16.gmra.mrb[0].mxu0 %v155
  %v638 = vpop.f32.mrb[0].mxu0
  %v639 = vadd.f32 %v590, %v638
  %v640 = vpop.f32.mrb[0].mxu0
  %v641 = vpop.f32.mrb[0].mxu0
  %v642 = vadd.f32 %v593, %v641
  %v643 = vpop.f32.mrb[0].mxu0
  %644 = vmatprep.mubr.bf16.mxu0 %v162
  %645 = vmatmul.mubr.bf16.gmra.mrb[0].mxu0 %v161
  %v646 = vpop.f32.mrb[0].mxu0
  %v647 = vadd.f32 %v598, %v646
  %v648 = vpop.f32.mrb[0].mxu0
  %v649 = vpop.f32.mrb[0].mxu0
  %v650 = vadd.f32 %v601, %v649
  %v651 = vpop.f32.mrb[0].mxu0
  %652 = vdwg.mxu0
  %653 = vmatprep.subr.bf16.mxu0 0
  %654 = vmatpush1.bf16.msra.mxu0 %v491
  %655 = vmatprep.subr.bf16.mxu0 0
  %656 = vmatpush1.bf16.msra.mxu0 %v492
  %657 = vmatprep.subr.bf16.mxu0 0
  %658 = vmatpush1.bf16.msra.mxu0 %v493
  %659 = vmatprep.subr.bf16.mxu0 0
  %660 = vmatpush1.bf16.msra.mxu0 %v494
  %661 = vmatprep.subr.bf16.mxu0 0
  %662 = vmatpush1.bf16.msra.mxu0 %v495
  %663 = vmatprep.subr.bf16.mxu0 0
  %664 = vmatpush1.bf16.msra.mxu0 %v496
  %665 = vmatprep.subr.bf16.mxu0 0
  %666 = vmatpush1.bf16.msra.mxu0 %v497
  %667 = vmatprep.subr.bf16.mxu0 0
  %668 = vmatpush1.bf16.msra.mxu0 %v498
  %669 = vmatprep.subr.bf16.mxu0 0
  %670 = vmatpush1.bf16.msra.mxu0 %v499
  %671 = vmatprep.subr.bf16.mxu0 0
  %672 = vmatpush1.bf16.msra.mxu0 %v500
  %673 = vmatprep.subr.bf16.mxu0 0
  %674 = vmatpush1.bf16.msra.mxu0 %v501
  %675 = vmatprep.subr.bf16.mxu0 0
  %676 = vmatpush1.bf16.msra.mxu0 %v502
  %677 = vmatprep.subr.bf16.mxu0 0
  %678 = vmatpush1.bf16.msra.mxu0 %v503
  %679 = vmatprep.subr.bf16.mxu0 0
  %680 = vmatpush1.bf16.msra.mxu0 %v504
  %681 = vmatprep.subr.bf16.mxu0 0
  %682 = vmatpush1.bf16.msra.mxu0 %v505
  %683 = vmatprep.subr.bf16.mxu0 0
  %684 = vmatpush1.bf16.msra.mxu0 %v506
  %685 = vmatprep.mubr.bf16.mxu0 %v158
  %686 = vmatmul.mubr.bf16.gmra.mrb[0].mxu0 %v157
  %v687 = vpop.f32.mrb[0].mxu0
  %v688 = vadd.f32 %v639, %v687
  %v689 = vpop.f32.mrb[0].mxu0
  %v690 = vpop.f32.mrb[0].mxu0
  %v691 = vadd.f32 %v642, %v690
  %v692 = vpop.f32.mrb[0].mxu0
  %693 = vmatprep.mubr.bf16.mxu0 %v164
  %694 = vmatmul.mubr.bf16.gmra.mrb[0].mxu0 %v163
  %v695 = vpop.f32.mrb[0].mxu0
  %v696 = vadd.f32 %v647, %v695
  %v697 = vpop.f32.mrb[0].mxu0
  %v698 = vpop.f32.mrb[0].mxu0
  %v699 = vadd.f32 %v650, %v698
  %v700 = vpop.f32.mrb[0].mxu0
  %701 = vdwg.mxu0
  %v702 = vsub.f32 0.0, %v688
  %v703 = vsub.f32 0.0, %v691
  %v704 = vsub.f32 0.0, %v696
  %v705 = vsub.f32 0.0, %v699
  %v706 = vmul.f32 %v702, 1.442695
  %v707 = vpow.pop %v706
  %v708 = vmul.f32 %v703, 1.442695
  %v709 = vpow.pop %v708
  %v710 = vmul.f32 %v704, 1.442695
  %v711 = vpow.pop %v710
  %v712 = vmul.f32 %v705, 1.442695
  %v713 = vpow.pop %v712
  %v714 = vadd.f32 %v707, 1.0
  %v715 = vadd.f32 %v709, 1.0
  %v716 = vadd.f32 %v711, 1.0
  %v717 = vadd.f32 %v713, 1.0
  %v718 = vrcp.pop %v714
  %v719 = vrcp.pop %v715
  %v720 = vrcp.pop %v716
  %v721 = vrcp.pop %v717
  %v722 = vmul.f32 %v688, %v718
  %v723 = vmul.f32 %v691, %v719
  %v724 = vmul.f32 %v696, %v720
  %v725 = vmul.f32 %v699, %v721
  %v726 = vrot.slane %v722, 7
  %v727 = vrot.slane %v723, 7
  %v728 = vrot.slane %v724, 7
  %v729 = vrot.slane %v725, 7
  %v730 = vsel %vm95, %v728, %v729
  %v731 = vsel %vm95, %v727, %v728
  %v732 = vsel %vm95, %v726, %v727
  %v733 = vsel %vm95, %v729, %v726
  %v734 = vsel %vm108, %v733, 0.0
  %v735 = vsel %vm109, %v732, 0.0
  %v736 = vsel %vm110, %v731, 0.0
  %v737 = vsel %vm111, %v730, 0.0
  %v738 = vrot.slane %v722, 1
  %v739 = vrot.slane %v723, 1
  %v740 = vrot.slane %v724, 1
  %v741 = vrot.slane %v725, 1
  %v742 = vsel %vm128, %v740, %v741
  %v743 = vsel %vm128, %v739, %v740
  %v744 = vsel %vm128, %v738, %v739
  %v745 = vsel %vm128, %v741, %v738
  %v746 = vsel %vm141, %v744, 0.0
  %v747 = vsel %vm142, %v743, 0.0
  %v748 = vsel %vm143, %v742, 0.0
  %v749 = vsel %vm144, %v745, 0.0
  %v750 = vpack.c.bf16 %v735, %v734
  %v751 = vpack.c.bf16 %v723, %v722
  %v752 = vpack.c.bf16 %v747, %v746
  %v753 = vpack.c.bf16 %v737, %v736
  %v754 = vpack.c.bf16 %v725, %v724
  %v755 = vpack.c.bf16 %v749, %v748
  %v756 = vld [vmem:[%s2] sm:$0xf]
  %v757 = vld [vmem:[%s2 + $0x4] sm:$0xf]
  %v758 = vld [vmem:[%s2 + $0x8] sm:$0xf]
  %v759 = vld [vmem:[%s2 + $0xc] sm:$0xf]
  %v760 = vld [vmem:[%s2 + $0x10] sm:$0xf]
  %v761 = vld [vmem:[%s2 + $0x14] sm:$0xf]
  %v762 = vld [vmem:[%s2 + $0x18] sm:$0xf]
  %v763 = vld [vmem:[%s2 + $0x1c] sm:$0xf]
  %v764 = vld [vmem:[%s2 + $0x20] sm:$0xf]
  %v765 = vld [vmem:[%s2 + $0x24] sm:$0xf]
  %v766 = vld [vmem:[%s2 + $0x28] sm:$0xf]
  %v767 = vld [vmem:[%s2 + $0x2c] sm:$0xf]
  %v768 = vld [vmem:[%s2 + $0x30] sm:$0xf]
  %v769 = vld [vmem:[%s2 + $0x34] sm:$0xf]
  %v770 = vld [vmem:[%s2 + $0x38] sm:$0xf]
  %v771 = vld [vmem:[%s2 + $0x3c] sm:$0xf]
  %v772 = vld [vmem:[%s2 + $0x40] sm:$0xf]
  %v773 = vld [vmem:[%s2 + $0x44] sm:$0xf]
  %v774 = vld [vmem:[%s2 + $0x48] sm:$0xf]
  %v775 = vld [vmem:[%s2 + $0x4c] sm:$0xf]
  %v776 = vld [vmem:[%s2 + $0x50] sm:$0xf]
  %v777 = vld [vmem:[%s2 + $0x54] sm:$0xf]
  %v778 = vld [vmem:[%s2 + $0x58] sm:$0xf]
  %v779 = vld [vmem:[%s2 + $0x5c] sm:$0xf]
  %v780 = vld [vmem:[%s2 + $0x60] sm:$0xf]
  %v781 = vld [vmem:[%s2 + $0x64] sm:$0xf]
  %v782 = vld [vmem:[%s2 + $0x68] sm:$0xf]
  %v783 = vld [vmem:[%s2 + $0x6c] sm:$0xf]
  %v784 = vld [vmem:[%s2 + $0x70] sm:$0xf]
  %v785 = vld [vmem:[%s2 + $0x74] sm:$0xf]
  %v786 = vld [vmem:[%s2 + $0x78] sm:$0xf]
  %v787 = vld [vmem:[%s2 + $0x7c] sm:$0xf]
  %v788 = vld [vmem:[%s2 + $0x80] sm:$0xf]
  %v789 = vld [vmem:[%s2 + $0x84] sm:$0xf]
  %v790 = vld [vmem:[%s2 + $0x88] sm:$0xf]
  %v791 = vld [vmem:[%s2 + $0x8c] sm:$0xf]
  %v792 = vld [vmem:[%s2 + $0x90] sm:$0xf]
  %v793 = vld [vmem:[%s2 + $0x94] sm:$0xf]
  %v794 = vld [vmem:[%s2 + $0x98] sm:$0xf]
  %v795 = vld [vmem:[%s2 + $0x9c] sm:$0xf]
  %v796 = vld [vmem:[%s2 + $0xa0] sm:$0xf]
  %v797 = vld [vmem:[%s2 + $0xa4] sm:$0xf]
  %v798 = vld [vmem:[%s2 + $0xa8] sm:$0xf]
  %v799 = vld [vmem:[%s2 + $0xac] sm:$0xf]
  %v800 = vld [vmem:[%s2 + $0xb0] sm:$0xf]
  %v801 = vld [vmem:[%s2 + $0xb4] sm:$0xf]
  %v802 = vld [vmem:[%s2 + $0xb8] sm:$0xf]
  %v803 = vld [vmem:[%s2 + $0xbc] sm:$0xf]
  %v804 = vld [vmem:[%s2 + $0xc0] sm:$0x1]
  %v805 = vunpack.c.l.bf16 %v804
  %v806 = vlaneseq
  %v807 = vshrl.u32 %v806, 7
  %v808 = vsub.s32 0, %v807
  %v809 = vrot.slane %v805, %v808
  %v858 = vunpack.c.l.b16 %v756
  %v859 = vunpack.c.l.b16 %v757
  %v860 = vunpack.c.l.b16 %v758
  %v861 = vunpack.c.l.b16 %v759
  %v862 = vunpack.c.l.b16 %v760
  %v863 = vunpack.c.l.b16 %v761
  %v864 = vunpack.c.l.b16 %v762
  %v865 = vunpack.c.l.b16 %v763
  %v866 = vunpack.c.l.b16 %v764
  %v867 = vunpack.c.l.b16 %v765
  %v868 = vunpack.c.l.b16 %v766
  %v869 = vunpack.c.l.b16 %v767
  %v870 = vunpack.c.l.b16 %v768
  %v871 = vunpack.c.l.b16 %v769
  %v872 = vunpack.c.l.b16 %v770
  %v873 = vunpack.c.l.b16 %v771
  %v874 = vunpack.c.l.b16 %v772
  %v875 = vunpack.c.l.b16 %v773
  %v876 = vunpack.c.l.b16 %v774
  %v877 = vunpack.c.l.b16 %v775
  %v878 = vunpack.c.l.b16 %v776
  %v879 = vunpack.c.l.b16 %v777
  %v880 = vunpack.c.l.b16 %v778
  %v881 = vunpack.c.l.b16 %v779
  %v882 = vunpack.c.l.b16 %v780
  %v883 = vunpack.c.l.b16 %v781
  %v884 = vunpack.c.l.b16 %v782
  %v885 = vunpack.c.l.b16 %v783
  %v886 = vunpack.c.l.b16 %v784
  %v887 = vunpack.c.l.b16 %v785
  %v888 = vunpack.c.l.b16 %v786
  %v889 = vunpack.c.l.b16 %v787
  %v890 = vunpack.c.l.b16 %v788
  %v891 = vunpack.c.l.b16 %v789
  %v892 = vunpack.c.l.b16 %v790
  %v893 = vunpack.c.l.b16 %v791
  %v894 = vunpack.c.l.b16 %v792
  %v895 = vunpack.c.l.b16 %v793
  %v896 = vunpack.c.l.b16 %v794
  %v897 = vunpack.c.l.b16 %v795
  %v898 = vunpack.c.l.b16 %v796
  %v899 = vunpack.c.l.b16 %v797
  %v900 = vunpack.c.l.b16 %v798
  %v901 = vunpack.c.l.b16 %v799
  %v902 = vunpack.c.l.b16 %v800
  %v903 = vunpack.c.l.b16 %v801
  %v904 = vunpack.c.l.b16 %v802
  %v905 = vunpack.c.l.b16 %v803
  %v906 = vpack.c.b16 %v859, %v858
  %v907 = vpack.c.b16 %v861, %v860
  %v908 = vpack.c.b16 %v863, %v862
  %v909 = vpack.c.b16 %v865, %v864
  %v910 = vpack.c.b16 %v867, %v866
  %v911 = vpack.c.b16 %v869, %v868
  %v912 = vpack.c.b16 %v871, %v870
  %v913 = vpack.c.b16 %v873, %v872
  %v914 = vpack.c.b16 %v875, %v874
  %v915 = vpack.c.b16 %v877, %v876
  %v916 = vpack.c.b16 %v879, %v878
  %v917 = vpack.c.b16 %v881, %v880
  %v918 = vpack.c.b16 %v883, %v882
  %v919 = vpack.c.b16 %v885, %v884
  %v920 = vpack.c.b16 %v887, %v886
  %v921 = vpack.c.b16 %v889, %v888
  %v922 = vpack.c.b16 %v891, %v890
  %v923 = vpack.c.b16 %v893, %v892
  %v924 = vpack.c.b16 %v895, %v894
  %v925 = vpack.c.b16 %v897, %v896
  %v926 = vpack.c.b16 %v899, %v898
  %v927 = vpack.c.b16 %v901, %v900
  %v928 = vpack.c.b16 %v903, %v902
  %v929 = vpack.c.b16 %v905, %v904
  %954 = vmatprep.subr.bf16.mxu0 0
  %955 = vmatpush1.bf16.msra.mxu0 %v906
  %956 = vmatprep.subr.bf16.mxu0 0
  %957 = vmatpush1.bf16.msra.mxu0 %v907
  %958 = vmatprep.subr.bf16.mxu0 0
  %959 = vmatpush1.bf16.msra.mxu0 %v908
  %960 = vmatprep.subr.bf16.mxu0 0
  %961 = vmatpush1.bf16.msra.mxu0 %v909
  %962 = vmatprep.subr.bf16.mxu0 0
  %963 = vmatpush1.bf16.msra.mxu0 %v910
  %964 = vmatprep.subr.bf16.mxu0 0
  %965 = vmatpush1.bf16.msra.mxu0 %v911
  %966 = vmatprep.subr.bf16.mxu0 0
  %967 = vmatpush1.bf16.msra.mxu0 %v912
  %968 = vmatprep.subr.bf16.mxu0 0
  %969 = vmatpush1.bf16.msra.mxu0 %v913
  %970 = vmatprep.subr.bf16.mxu0 0
  %971 = vmatpush1.bf16.msra.mxu0 %v914
  %972 = vmatprep.subr.bf16.mxu0 0
  %973 = vmatpush1.bf16.msra.mxu0 %v915
  %974 = vmatprep.subr.bf16.mxu0 0
  %975 = vmatpush1.bf16.msra.mxu0 %v916
  %976 = vmatprep.subr.bf16.mxu0 0
  %977 = vmatpush1.bf16.msra.mxu0 %v917
  %978 = vmatprep.subr.bf16.mxu0 0
  %979 = vmatpush1.bf16.msra.mxu0 %v918
  %980 = vmatprep.subr.bf16.mxu0 0
  %981 = vmatpush1.bf16.msra.mxu0 %v919
  %982 = vmatprep.subr.bf16.mxu0 0
  %983 = vmatpush1.bf16.msra.mxu0 %v920
  %984 = vmatprep.subr.bf16.mxu0 0
  %985 = vmatpush1.bf16.msra.mxu0 %v921
  %986 = vmatprep.mubr.bf16.mxu0 %v751
  %987 = vmatmul.mubr.bf16.gmra.mrb[0].mxu0 %v750
  %v988 = vpop.f32.mrb[0].mxu0
  %v989 = vadd.f32 %v809, %v988
  %v990 = vpop.f32.mrb[0].mxu0
  %v991 = vpop.f32.mrb[0].mxu0
  %v992 = vadd.f32 %v809, %v991
  %v993 = vpop.f32.mrb[0].mxu0
  %994 = vmatprep.mubr.bf16.mxu0 %v754
  %995 = vmatmul.mubr.bf16.gmra.mrb[0].mxu0 %v753
  %v996 = vpop.f32.mrb[0].mxu0
  %v997 = vadd.f32 %v809, %v996
  %v998 = vpop.f32.mrb[0].mxu0
  %v999 = vpop.f32.mrb[0].mxu0
  %v1000 = vadd.f32 %v809, %v999
  %v1001 = vpop.f32.mrb[0].mxu0
  %1002 = vdwg.mxu0
  %1003 = vmatprep.subr.bf16.mxu0 0
  %1004 = vmatpush1.bf16.msra.mxu0 %v922
  %1005 = vmatprep.subr.bf16.mxu0 0
  %1006 = vmatpush1.bf16.msra.mxu0 %v923
  %1007 = vmatprep.subr.bf16.mxu0 0
  %1008 = vmatpush1.bf16.msra.mxu0 %v924
  %1009 = vmatprep.subr.bf16.mxu0 0
  %1010 = vmatpush1.bf16.msra.mxu0 %v925
  %1011 = vmatprep.subr.bf16.mxu0 0
  %1012 = vmatpush1.bf16.msra.mxu0 %v926
  %1013 = vmatprep.subr.bf16.mxu0 0
  %1014 = vmatpush1.bf16.msra.mxu0 %v927
  %1015 = vmatprep.subr.bf16.mxu0 0
  %1016 = vmatpush1.bf16.msra.mxu0 %v928
  %1017 = vmatprep.subr.bf16.mxu0 0
  %1018 = vmatpush1.bf16.msra.mxu0 %v929
  %1019 = vmatprep.subr.bf16.mxu0 0
  %1020 = vmatpush1.bf16.msra.mxu0 0
  %1021 = vmatprep.subr.bf16.mxu0 0
  %1022 = vmatpush1.bf16.msra.mxu0 0
  %1023 = vmatprep.subr.bf16.mxu0 0
  %1024 = vmatpush1.bf16.msra.mxu0 0
  %1025 = vmatprep.subr.bf16.mxu0 0
  %1026 = vmatpush1.bf16.msra.mxu0 0
  %1027 = vmatprep.subr.bf16.mxu0 0
  %1028 = vmatpush1.bf16.msra.mxu0 0
  %1029 = vmatprep.subr.bf16.mxu0 0
  %1030 = vmatpush1.bf16.msra.mxu0 0
  %1031 = vmatprep.subr.bf16.mxu0 0
  %1032 = vmatpush1.bf16.msra.mxu0 0
  %1033 = vmatprep.subr.bf16.mxu0 0
  %1034 = vmatpush1.bf16.msra.mxu0 0
  %1035 = vmatprep.mubr.bf16.mxu0 0
  %1036 = vmatmul.mubr.bf16.gmra.mrb[0].mxu0 %v752
  %v1037 = vpop.f32.mrb[0].mxu0
  %v1038 = vadd.f32 %v989, %v1037
  %v1039 = vpop.f32.mrb[0].mxu0
  %v1040 = vpop.f32.mrb[0].mxu0
  %v1041 = vadd.f32 %v992, %v1040
  %v1042 = vpop.f32.mrb[0].mxu0
  %1043 = vmatprep.mubr.bf16.mxu0 0
  %1044 = vmatmul.mubr.bf16.gmra.mrb[0].mxu0 %v755
  %v1045 = vpop.f32.mrb[0].mxu0
  %v1046 = vadd.f32 %v997, %v1045
  %v1047 = vpop.f32.mrb[0].mxu0
  %v1048 = vpop.f32.mrb[0].mxu0
  %v1049 = vadd.f32 %v1000, %v1048
  %v1050 = vpop.f32.mrb[0].mxu0
  %1051 = vdwg.mxu0
  %v1052 = vsub.f32 0.0, %v1038
  %v1053 = vsub.f32 0.0, %v1041
  %v1054 = vsub.f32 0.0, %v1046
  %v1055 = vsub.f32 0.0, %v1049
  %v1056 = vmul.f32 %v1052, 1.442695
  %v1057 = vpow.pop %v1056
  %v1058 = vmul.f32 %v1053, 1.442695
  %v1059 = vpow.pop %v1058
  %v1060 = vmul.f32 %v1054, 1.442695
  %v1061 = vpow.pop %v1060
  %v1062 = vmul.f32 %v1055, 1.442695
  %v1063 = vpow.pop %v1062
  %v1064 = vadd.f32 %v1057, 1.0
  %v1065 = vadd.f32 %v1059, 1.0
  %v1066 = vadd.f32 %v1061, 1.0
  %v1067 = vadd.f32 %v1063, 1.0
  %v1068 = vrcp.pop %v1064
  %v1069 = vrcp.pop %v1065
  %v1070 = vrcp.pop %v1066
  %v1071 = vrcp.pop %v1067
  %v1072 = vmul.f32 %v1038, %v1068
  %v1073 = vmul.f32 %v1041, %v1069
  %v1074 = vmul.f32 %v1046, %v1070
  %v1075 = vmul.f32 %v1049, %v1071
  %v1076 = vsub.f32 %v1072, %v688
  %v1077 = vsub.f32 %v1073, %v691
  %v1078 = vsub.f32 %v1074, %v696
  %v1079 = vsub.f32 %v1075, %v699
  %v1080 = vrot.slane %v1076, 7
  %v1081 = vrot.slane %v1077, 7
  %v1082 = vrot.slane %v1078, 7
  %v1083 = vrot.slane %v1079, 7
  %v1084 = vsel %vm95, %v1082, %v1083
  %v1085 = vsel %vm95, %v1081, %v1082
  %v1086 = vsel %vm95, %v1080, %v1081
  %v1087 = vsel %vm95, %v1083, %v1080
  %v1088 = vsel %vm108, %v1087, 0.0
  %v1089 = vsel %vm109, %v1086, 0.0
  %v1090 = vsel %vm110, %v1085, 0.0
  %v1091 = vsel %vm111, %v1084, 0.0
  %v1092 = vrot.slane %v1076, 1
  %v1093 = vrot.slane %v1077, 1
  %v1094 = vrot.slane %v1078, 1
  %v1095 = vrot.slane %v1079, 1
  %v1096 = vsel %vm128, %v1094, %v1095
  %v1097 = vsel %vm128, %v1093, %v1094
  %v1098 = vsel %vm128, %v1092, %v1093
  %v1099 = vsel %vm128, %v1095, %v1092
  %v1100 = vsel %vm141, %v1098, 0.0
  %v1101 = vsel %vm142, %v1097, 0.0
  %v1102 = vsel %vm143, %v1096, 0.0
  %v1103 = vsel %vm144, %v1099, 0.0
  %v1104 = vpack.c.bf16 %v1089, %v1088
  %v1105 = vpack.c.bf16 %v1077, %v1076
  %v1106 = vpack.c.bf16 %v1101, %v1100
  %v1107 = vpack.c.bf16 %v1091, %v1090
  %v1108 = vpack.c.bf16 %v1079, %v1078
  %v1109 = vpack.c.bf16 %v1103, %v1102
  %v1110 = vld [vmem:[%s3] sm:$0xf]
  %v1111 = vld [vmem:[%s3 + $0x4] sm:$0xf]
  %v1112 = vld [vmem:[%s3 + $0x8] sm:$0xf]
  %v1113 = vld [vmem:[%s3 + $0xc] sm:$0xf]
  %v1114 = vld [vmem:[%s3 + $0x10] sm:$0xf]
  %v1115 = vld [vmem:[%s3 + $0x14] sm:$0xf]
  %v1116 = vld [vmem:[%s3 + $0x18] sm:$0xf]
  %v1117 = vld [vmem:[%s3 + $0x1c] sm:$0xf]
  %v1118 = vld [vmem:[%s3 + $0x20] sm:$0xf]
  %v1119 = vld [vmem:[%s3 + $0x24] sm:$0xf]
  %v1120 = vld [vmem:[%s3 + $0x28] sm:$0xf]
  %v1121 = vld [vmem:[%s3 + $0x2c] sm:$0xf]
  %v1122 = vld [vmem:[%s3 + $0x30] sm:$0xf]
  %v1123 = vld [vmem:[%s3 + $0x34] sm:$0xf]
  %v1124 = vld [vmem:[%s3 + $0x38] sm:$0xf]
  %v1125 = vld [vmem:[%s3 + $0x3c] sm:$0xf]
  %v1126 = vld [vmem:[%s3 + $0x40] sm:$0xf]
  %v1127 = vld [vmem:[%s3 + $0x44] sm:$0xf]
  %v1128 = vld [vmem:[%s3 + $0x48] sm:$0xf]
  %v1129 = vld [vmem:[%s3 + $0x4c] sm:$0xf]
  %v1130 = vld [vmem:[%s3 + $0x50] sm:$0xf]
  %v1131 = vld [vmem:[%s3 + $0x54] sm:$0xf]
  %v1132 = vld [vmem:[%s3 + $0x58] sm:$0xf]
  %v1133 = vld [vmem:[%s3 + $0x5c] sm:$0xf]
  %v1134 = vld [vmem:[%s3 + $0x60] sm:$0xf]
  %v1135 = vld [vmem:[%s3 + $0x64] sm:$0xf]
  %v1136 = vld [vmem:[%s3 + $0x68] sm:$0xf]
  %v1137 = vld [vmem:[%s3 + $0x6c] sm:$0xf]
  %v1138 = vld [vmem:[%s3 + $0x70] sm:$0xf]
  %v1139 = vld [vmem:[%s3 + $0x74] sm:$0xf]
  %v1140 = vld [vmem:[%s3 + $0x78] sm:$0xf]
  %v1141 = vld [vmem:[%s3 + $0x7c] sm:$0xf]
  %v1142 = vld [vmem:[%s3 + $0x80] sm:$0xf]
  %v1143 = vld [vmem:[%s3 + $0x84] sm:$0xf]
  %v1144 = vld [vmem:[%s3 + $0x88] sm:$0xf]
  %v1145 = vld [vmem:[%s3 + $0x8c] sm:$0xf]
  %v1146 = vld [vmem:[%s3 + $0x90] sm:$0xf]
  %v1147 = vld [vmem:[%s3 + $0x94] sm:$0xf]
  %v1148 = vld [vmem:[%s3 + $0x98] sm:$0xf]
  %v1149 = vld [vmem:[%s3 + $0x9c] sm:$0xf]
  %v1150 = vld [vmem:[%s3 + $0xa0] sm:$0xf]
  %v1151 = vld [vmem:[%s3 + $0xa4] sm:$0xf]
  %v1152 = vld [vmem:[%s3 + $0xa8] sm:$0xf]
  %v1153 = vld [vmem:[%s3 + $0xac] sm:$0xf]
  %v1154 = vld [vmem:[%s3 + $0xb0] sm:$0xf]
  %v1155 = vld [vmem:[%s3 + $0xb4] sm:$0xf]
  %v1156 = vld [vmem:[%s3 + $0xb8] sm:$0xf]
  %v1157 = vld [vmem:[%s3 + $0xbc] sm:$0xf]
  %v1158 = vld [vmem:[%s3 + $0xc0] sm:$0x1]
  %v1159 = vunpack.c.l.bf16 %v1158
  %v1160 = vlaneseq
  %v1161 = vshrl.u32 %v1160, 7
  %v1162 = vsub.s32 0, %v1161
  %v1163 = vrot.slane %v1159, %v1162
  %v1212 = vunpack.c.l.b16 %v1110
  %v1213 = vunpack.c.l.b16 %v1111
  %v1214 = vunpack.c.l.b16 %v1112
  %v1215 = vunpack.c.l.b16 %v1113
  %v1216 = vunpack.c.l.b16 %v1114
  %v1217 = vunpack.c.l.b16 %v1115
  %v1218 = vunpack.c.l.b16 %v1116
  %v1219 = vunpack.c.l.b16 %v1117
  %v1220 = vunpack.c.l.b16 %v1118
  %v1221 = vunpack.c.l.b16 %v1119
  %v1222 = vunpack.c.l.b16 %v1120
  %v1223 = vunpack.c.l.b16 %v1121
  %v1224 = vunpack.c.l.b16 %v1122
  %v1225 = vunpack.c.l.b16 %v1123
  %v1226 = vunpack.c.l.b16 %v1124
  %v1227 = vunpack.c.l.b16 %v1125
  %v1228 = vunpack.c.l.b16 %v1126
  %v1229 = vunpack.c.l.b16 %v1127
  %v1230 = vunpack.c.l.b16 %v1128
  %v1231 = vunpack.c.l.b16 %v1129
  %v1232 = vunpack.c.l.b16 %v1130
  %v1233 = vunpack.c.l.b16 %v1131
  %v1234 = vunpack.c.l.b16 %v1132
  %v1235 = vunpack.c.l.b16 %v1133
  %v1236 = vunpack.c.l.b16 %v1134
  %v1237 = vunpack.c.l.b16 %v1135
  %v1238 = vunpack.c.l.b16 %v1136
  %v1239 = vunpack.c.l.b16 %v1137
  %v1240 = vunpack.c.l.b16 %v1138
  %v1241 = vunpack.c.l.b16 %v1139
  %v1242 = vunpack.c.l.b16 %v1140
  %v1243 = vunpack.c.l.b16 %v1141
  %v1244 = vunpack.c.l.b16 %v1142
  %v1245 = vunpack.c.l.b16 %v1143
  %v1246 = vunpack.c.l.b16 %v1144
  %v1247 = vunpack.c.l.b16 %v1145
  %v1248 = vunpack.c.l.b16 %v1146
  %v1249 = vunpack.c.l.b16 %v1147
  %v1250 = vunpack.c.l.b16 %v1148
  %v1251 = vunpack.c.l.b16 %v1149
  %v1252 = vunpack.c.l.b16 %v1150
  %v1253 = vunpack.c.l.b16 %v1151
  %v1254 = vunpack.c.l.b16 %v1152
  %v1255 = vunpack.c.l.b16 %v1153
  %v1256 = vunpack.c.l.b16 %v1154
  %v1257 = vunpack.c.l.b16 %v1155
  %v1258 = vunpack.c.l.b16 %v1156
  %v1259 = vunpack.c.l.b16 %v1157
  %v1260 = vpack.c.b16 %v1213, %v1212
  %v1261 = vpack.c.b16 %v1215, %v1214
  %v1262 = vpack.c.b16 %v1217, %v1216
  %v1263 = vpack.c.b16 %v1219, %v1218
  %v1264 = vpack.c.b16 %v1221, %v1220
  %v1265 = vpack.c.b16 %v1223, %v1222
  %v1266 = vpack.c.b16 %v1225, %v1224
  %v1267 = vpack.c.b16 %v1227, %v1226
  %v1268 = vpack.c.b16 %v1229, %v1228
  %v1269 = vpack.c.b16 %v1231, %v1230
  %v1270 = vpack.c.b16 %v1233, %v1232
  %v1271 = vpack.c.b16 %v1235, %v1234
  %v1272 = vpack.c.b16 %v1237, %v1236
  %v1273 = vpack.c.b16 %v1239, %v1238
  %v1274 = vpack.c.b16 %v1241, %v1240
  %v1275 = vpack.c.b16 %v1243, %v1242
  %v1276 = vpack.c.b16 %v1245, %v1244
  %v1277 = vpack.c.b16 %v1247, %v1246
  %v1278 = vpack.c.b16 %v1249, %v1248
  %v1279 = vpack.c.b16 %v1251, %v1250
  %v1280 = vpack.c.b16 %v1253, %v1252
  %v1281 = vpack.c.b16 %v1255, %v1254
  %v1282 = vpack.c.b16 %v1257, %v1256
  %v1283 = vpack.c.b16 %v1259, %v1258
  %1308 = vmatprep.subr.bf16.mxu0 0
  %1309 = vmatpush1.bf16.msra.mxu0 %v1260
  %1310 = vmatprep.subr.bf16.mxu0 0
  %1311 = vmatpush1.bf16.msra.mxu0 %v1261
  %1312 = vmatprep.subr.bf16.mxu0 0
  %1313 = vmatpush1.bf16.msra.mxu0 %v1262
  %1314 = vmatprep.subr.bf16.mxu0 0
  %1315 = vmatpush1.bf16.msra.mxu0 %v1263
  %1316 = vmatprep.subr.bf16.mxu0 0
  %1317 = vmatpush1.bf16.msra.mxu0 %v1264
  %1318 = vmatprep.subr.bf16.mxu0 0
  %1319 = vmatpush1.bf16.msra.mxu0 %v1265
  %1320 = vmatprep.subr.bf16.mxu0 0
  %1321 = vmatpush1.bf16.msra.mxu0 %v1266
  %1322 = vmatprep.subr.bf16.mxu0 0
  %1323 = vmatpush1.bf16.msra.mxu0 %v1267
  %1324 = vmatprep.subr.bf16.mxu0 0
  %1325 = vmatpush1.bf16.msra.mxu0 %v1268
  %1326 = vmatprep.subr.bf16.mxu0 0
  %1327 = vmatpush1.bf16.msra.mxu0 %v1269
  %1328 = vmatprep.subr.bf16.mxu0 0
  %1329 = vmatpush1.bf16.msra.mxu0 %v1270
  %1330 = vmatprep.subr.bf16.mxu0 0
  %1331 = vmatpush1.bf16.msra.mxu0 %v1271
  %1332 = vmatprep.subr.bf16.mxu0 0
  %1333 = vmatpush1.bf16.msra.mxu0 %v1272
  %1334 = vmatprep.subr.bf16.mxu0 0
  %1335 = vmatpush1.bf16.msra.mxu0 %v1273
  %1336 = vmatprep.subr.bf16.mxu0 0
  %1337 = vmatpush1.bf16.msra.mxu0 %v1274
  %1338 = vmatprep.subr.bf16.mxu0 0
  %1339 = vmatpush1.bf16.msra.mxu0 %v1275
  %1340 = vmatprep.mubr.bf16.mxu0 %v1105
  %1341 = vmatmul.mubr.bf16.gmra.mrb[0].mxu0 %v1104
  %v1342 = vpop.f32.mrb[0].mxu0
  %v1343 = vadd.f32 %v1163, %v1342
  %v1344 = vpop.f32.mrb[0].mxu0
  %v1345 = vpop.f32.mrb[0].mxu0
  %v1346 = vadd.f32 %v1163, %v1345
  %v1347 = vpop.f32.mrb[0].mxu0
  %1348 = vmatprep.mubr.bf16.mxu0 %v1108
  %1349 = vmatmul.mubr.bf16.gmra.mrb[0].mxu0 %v1107
  %v1350 = vpop.f32.mrb[0].mxu0
  %v1351 = vadd.f32 %v1163, %v1350
  %v1352 = vpop.f32.mrb[0].mxu0
  %v1353 = vpop.f32.mrb[0].mxu0
  %v1354 = vadd.f32 %v1163, %v1353
  %v1355 = vpop.f32.mrb[0].mxu0
  %1356 = vdwg.mxu0
  %1357 = vmatprep.subr.bf16.mxu0 0
  %1358 = vmatpush1.bf16.msra.mxu0 %v1276
  %1359 = vmatprep.subr.bf16.mxu0 0
  %1360 = vmatpush1.bf16.msra.mxu0 %v1277
  %1361 = vmatprep.subr.bf16.mxu0 0
  %1362 = vmatpush1.bf16.msra.mxu0 %v1278
  %1363 = vmatprep.subr.bf16.mxu0 0
  %1364 = vmatpush1.bf16.msra.mxu0 %v1279
  %1365 = vmatprep.subr.bf16.mxu0 0
  %1366 = vmatpush1.bf16.msra.mxu0 %v1280
  %1367 = vmatprep.subr.bf16.mxu0 0
  %1368 = vmatpush1.bf16.msra.mxu0 %v1281
  %1369 = vmatprep.subr.bf16.mxu0 0
  %1370 = vmatpush1.bf16.msra.mxu0 %v1282
  %1371 = vmatprep.subr.bf16.mxu0 0
  %1372 = vmatpush1.bf16.msra.mxu0 %v1283
  %1373 = vmatprep.subr.bf16.mxu0 0
  %1374 = vmatpush1.bf16.msra.mxu0 0
  %1375 = vmatprep.subr.bf16.mxu0 0
  %1376 = vmatpush1.bf16.msra.mxu0 0
  %1377 = vmatprep.subr.bf16.mxu0 0
  %1378 = vmatpush1.bf16.msra.mxu0 0
  %1379 = vmatprep.subr.bf16.mxu0 0
  %1380 = vmatpush1.bf16.msra.mxu0 0
  %1381 = vmatprep.subr.bf16.mxu0 0
  %1382 = vmatpush1.bf16.msra.mxu0 0
  %1383 = vmatprep.subr.bf16.mxu0 0
  %1384 = vmatpush1.bf16.msra.mxu0 0
  %1385 = vmatprep.subr.bf16.mxu0 0
  %1386 = vmatpush1.bf16.msra.mxu0 0
  %1387 = vmatprep.subr.bf16.mxu0 0
  %1388 = vmatpush1.bf16.msra.mxu0 0
  %1389 = vmatprep.mubr.bf16.mxu0 0
  %1390 = vmatmul.mubr.bf16.gmra.mrb[0].mxu0 %v1106
  %v1391 = vpop.f32.mrb[0].mxu0
  %v1392 = vadd.f32 %v1343, %v1391
  %v1393 = vpop.f32.mrb[0].mxu0
  %v1394 = vpop.f32.mrb[0].mxu0
  %v1395 = vadd.f32 %v1346, %v1394
  %v1396 = vpop.f32.mrb[0].mxu0
  %1397 = vmatprep.mubr.bf16.mxu0 0
  %1398 = vmatmul.mubr.bf16.gmra.mrb[0].mxu0 %v1109
  %v1399 = vpop.f32.mrb[0].mxu0
  %v1400 = vadd.f32 %v1351, %v1399
  %v1401 = vpop.f32.mrb[0].mxu0
  %v1402 = vpop.f32.mrb[0].mxu0
  %v1403 = vadd.f32 %v1354, %v1402
  %v1404 = vpop.f32.mrb[0].mxu0
  %1405 = vdwg.mxu0
  %1406 = vst [vmem:[%s4] sm:$0xff] %v1392
  %1407 = vst [vmem:[%s4 + $0x8] sm:$0xff] %v1395
  %1408 = vst [vmem:[%s4 + $0x10] sm:$0xff] %v1400
  %1409 = vst [vmem:[%s4 + $0x18] sm:$0xff] %v1403
  // Predicated region
  $region18: #{forward.1} parent=0 // pred_check
    _
  $region19: #{forward.1} parent=0 // pred_check_branch
    %1411 = sbr.rel (0) target = $region21
  $region20: #{forward.1} parent=0 // pred_region
    _
  $region21: #{forward.1} parent=0 // pred_fallthru
    _
  // Predicated region
  $region22: #{forward.1} parent=0 // pred_check
    _
  $region23: #{forward.1} parent=0 // pred_check_branch
    %1413 = sbr.rel (0) target = $region25
  $region24: #{forward.1} parent=0 // pred_region
    _
  $region25: #{forward.1} parent=0 // pred_fallthru
    _

</llo_original>
